<compile_context>
chip_gen: v7x
topology: tpu7x:2x2x1
jax: 0.10.0
libtpu: 0.0.40
codegen_flags: <defaults>
</compile_context>

<pallas_src>
import jax
import jax.numpy as jnp
from jax.experimental import pallas as pl
from jax.experimental.pallas import tpu as pltpu


def _round_up(x: int, m: int) -> int:
    return ((x + m - 1) // m) * m


def sigmod_layer_kernel(x_ref, w1t_ref, w2t_ref, o_ref):
    """Fused: out = relu(x @ W1t) @ W2t, weights pre-transposed to (in, out)."""
    x = x_ref[...]

    # layer 0: x @ W1^T  (W1t is already (in, out), plain row-major dot)
    h = jnp.dot(x, w1t_ref[...], preferred_element_type=jnp.float32)
    h = jnp.maximum(h, 0.0)

    # layer 1: no activation on the last layer
    y = jnp.dot(h.astype(w2t_ref.dtype), w2t_ref[...],
                preferred_element_type=jnp.float32)

    o_ref[...] = y.astype(o_ref.dtype)


def sigmod_layer(x, w1, w2, *, block_n=None, compute_dtype=None,
                 single_buffer_weights=None):
    """x: (N, E) activations. w1, w2: PyTorch-style (out, in) = (E, E) weights.

    compute_dtype: dtype fed to the MXU (e.g. jnp.bfloat16 for the fast path);
      accumulation is always f32 and the output keeps x.dtype.
    """
    N, E = x.shape
    assert w1.shape == (E, E) and w2.shape == (E, E)

    out_dtype = x.dtype
    if compute_dtype is None:
        compute_dtype = x.dtype
    compute_dtype = jnp.dtype(compute_dtype)
    itemsize = compute_dtype.itemsize
    out_itemsize = jnp.dtype(out_dtype).itemsize
    sublane = max(8, 32 // itemsize)          # 8 (f32) / 16 (bf16) / 32 (int8,fp8)

    # ---- generation-aware VMEM budget -------------------------------------
    try:
        vmem_cap = int(pltpu.get_tpu_info().vmem_capacity_bytes)
    except Exception:
        vmem_cap = 64 << 20                   # conservative (v7x per-TC size)
    budget = int(0.85 * vmem_cap)

    # ---- lane-dense feature dim (pad only when it pays off) ----------------
    # Last block dim equal to the full array dim is always legal, so tiny E
    # (< 128) skips the pad/slice entirely; larger non-multiples get padded to
    # 128 for unmasked full-vreg loads/stores.
    if E % 128 == 0 or E < 128:
        e_pad = E
    else:
        e_pad = _round_up(E, 128)

    # One-time wrapper-side cast + transpose of the weights (negligible, paid
    # once; guarantees no per-grid-step XLU transpose inside the kernel).
    xp = x.astype(compute_dtype)
    w1t = jnp.asarray(w1, compute_dtype).T    # (in, out)
    w2t = jnp.asarray(w2, compute_dtype).T    # (in, out)
    if e_pad != E:
        xp = jnp.pad(xp, ((0, 0), (0, e_pad - E)))
        w1t = jnp.pad(w1t, ((0, e_pad - E), (0, e_pad - E)))
        w2t = jnp.pad(w2t, ((0, e_pad - E), (0, e_pad - E)))

    # ---- resident weights: single- vs double-buffer ------------------------
    w_bytes_db = 2 * 2 * e_pad * e_pad * itemsize   # 2 weights, double-buffered
    if single_buffer_weights is None:
        single_buffer_weights = w_bytes_db > budget // 4
    w_buf = 1 if single_buffer_weights else 2

    # ---- row tile ----------------------------------------------------------
    if block_n is None:
        cap = 1024 if vmem_cap >= (100 << 20) else 512   # bigger tiles on 128 MiB chips
        target = max(sublane, pl.cdiv(N, 2))             # >=2 steps -> megacore on v7x
        block_n = min(cap, _round_up(target, sublane))
    block_n = min(_round_up(block_n, sublane), _round_up(N, sublane))
    block_n = max(block_n, sublane)

    def _vmem_bytes(bn):
        return (2 * bn * e_pad * itemsize             # x tile, double-buffered
                + 2 * bn * e_pad * out_itemsize       # out tile, double-buffered
                + w_buf * 2 * e_pad * e_pad * itemsize   # resident weights
                + 2 * bn * e_pad * 4)                 # f32 intermediates

    while block_n > sublane and _vmem_bytes(block_n) > budget:
        block_n = max(sublane, _round_up(block_n // 2, sublane))

    vmem_limit = min(budget, max(int(1.3 * _vmem_bytes(block_n)), 32 << 20))

    grid = (pl.cdiv(N, block_n),)

    if single_buffer_weights:
        w_spec = pl.BlockSpec((e_pad, e_pad), lambda i: (0, 0),
                              pipeline_mode=pl.Buffered(1))
    else:
        w_spec = pl.BlockSpec((e_pad, e_pad), lambda i: (0, 0))

    cost = pl.CostEstimate(
        flops=4 * N * e_pad * e_pad,                              # two N x E x E matmuls
        transcendentals=0,
        bytes_accessed=(N * e_pad * itemsize                      # x read
                        + 2 * e_pad * e_pad * itemsize            # weights read
                        + N * e_pad * out_itemsize))              # out write

    out = pl.pallas_call(
        sigmod_layer_kernel,
        out_shape=jax.ShapeDtypeStruct((N, e_pad), out_dtype),
        grid_spec=pltpu.PrefetchScalarGridSpec(
            num_scalar_prefetch=0,
            grid=grid,
            in_specs=[
                pl.BlockSpec((block_n, e_pad), lambda i: (i, 0)),  # x row tile
                w_spec,                                            # W1^T, resident
                w_spec,                                            # W2^T, resident
            ],
            out_specs=pl.BlockSpec((block_n, e_pad), lambda i: (i, 0)),
        ),
        compiler_params=pltpu.CompilerParams(
            dimension_semantics=("parallel",),
            vmem_limit_bytes=vmem_limit),
        cost_estimate=cost,
    )(xp, w1t, w2t)

    if e_pad != E:
        out = out[:, :E]
    return out


def sigmod_layer_ref(x, w1, w2):
    """Pure-JAX reference matching the PyTorch forward exactly."""
    h = jnp.maximum(x @ w1.T, 0.0)
    return h @ w2.T


def sigmod_layer_ref_bf16(x, w1, w2):
    """Reference matching the kernel's bf16-operand / f32-accumulate math."""
    c = lambda a: a.astype(jnp.bfloat16).astype(jnp.float32)
    h = jnp.maximum(c(x) @ c(w1).T, 0.0)
    return c(h) @ c(w2).T


if __name__ == "__main__":
    key = jax.random.PRNGKey(0)

    # --- small case: shapes implied by the module (embed=32, a few rows) ---
    embed, batch = 32, 8
    kx, k1, k2, key = jax.random.split(key, 4)
    x = jax.random.normal(kx, (batch, embed), dtype=jnp.float32)
    bound = 1.0 / (embed ** 0.5)
    w1 = jax.random.uniform(k1, (embed, embed), jnp.float32, -bound, bound)
    w2 = jax.random.uniform(k2, (embed, embed), jnp.float32, -bound, bound)

    out = jax.block_until_ready(sigmod_layer(x, w1, w2))
    ref = sigmod_layer_ref(x, w1, w2)
    assert out.shape == (batch, embed)
    assert out.dtype == x.dtype
    assert jnp.allclose(out, ref, atol=1e-5, rtol=1e-5)

    # --- medium case: multi-step 'parallel' grid, lane-dense E, f32 path ---
    embed, batch = 256, 512
    kx, k1, k2, key = jax.random.split(key, 4)
    x = jax.random.normal(kx, (batch, embed), dtype=jnp.float32)
    bound = 1.0 / (embed ** 0.5)
    w1 = jax.random.uniform(k1, (embed, embed), jnp.float32, -bound, bound)
    w2 = jax.random.uniform(k2, (embed, embed), jnp.float32, -bound, bound)

    out = jax.block_until_ready(sigmod_layer(x, w1, w2))
    ref = sigmod_layer_ref(x, w1, w2)
    assert out.shape == (batch, embed)
    assert jnp.allclose(out, ref, atol=5e-4, rtol=5e-4)

    # --- same inputs on the bf16 MXU fast path (f32 accumulation) ----------
    out_bf = jax.block_until_ready(
        sigmod_layer(x, w1, w2, compute_dtype=jnp.bfloat16))
    ref_bf = sigmod_layer_ref_bf16(x, w1, w2)
    assert out_bf.shape == (batch, embed)
    assert out_bf.dtype == jnp.float32
    assert jnp.allclose(out_bf, ref_bf, atol=2e-3, rtol=2e-3)

    print("KERNEL_OK")
</pallas_src>

<mosaic_0001>
module attributes {stable_mosaic.version = 11 : i64} {
  func.func @sigmod_layer_kernel(%arg0: i32, %arg1: memref<8x32xf32, #tpu.memory_space<vmem>>, %arg2: memref<32x32xf32, #tpu.memory_space<vmem>>, %arg3: memref<32x32xf32, #tpu.memory_space<vmem>>, %arg4: memref<8x32xf32, #tpu.memory_space<vmem>>) attributes {dimension_semantics = [#tpu.dimension_semantics<parallel>], iteration_bounds = array<i64: 1>, scalar_prefetch = 0 : i64, scratch_operands = 0 : i64, tpu.core_type = #tpu.core_type<tc>, window_params = [{transform_indices = @transform_0, window_bounds = array<i64: 8, 32>}, {pipeline_mode = #tpu.pipeline_mode<synchronous>, transform_indices = @transform_1, window_bounds = array<i64: 32, 32>}, {pipeline_mode = #tpu.pipeline_mode<synchronous>, transform_indices = @transform_2, window_bounds = array<i64: 32, 32>}, {transform_indices = @transform_3, window_bounds = array<i64: 8, 32>}]} {
    %c0 = arith.constant 0 : index
    %c0_0 = arith.constant 0 : index
    %0 = vector.load %arg1[%c0, %c0_0] : memref<8x32xf32, #tpu.memory_space<vmem>>, vector<8x32xf32>
    %c0_1 = arith.constant 0 : index
    %c0_2 = arith.constant 0 : index
    %1 = vector.load %arg2[%c0_1, %c0_2] : memref<32x32xf32, #tpu.memory_space<vmem>>, vector<32x32xf32>
    %cst = arith.constant dense<0.000000e+00> : vector<8x32xf32>
    %2 = tpu.matmul %0, %1, %cst {dimension_numbers = #tpu.dot_dimension_numbers<[1], [0], [0], [1], [0, 0, 1, 1], [], []>} : vector<8x32xf32>, vector<32x32xf32>, vector<8x32xf32> -> vector<8x32xf32>
    %cst_3 = arith.constant 0.000000e+00 : f32
    %3 = vector.broadcast %cst_3 : f32 to vector<8x32xf32>
    %4 = arith.maximumf %2, %3 : vector<8x32xf32>
    %c0_4 = arith.constant 0 : index
    %c0_5 = arith.constant 0 : index
    %5 = vector.load %arg3[%c0_4, %c0_5] : memref<32x32xf32, #tpu.memory_space<vmem>>, vector<32x32xf32>
    %cst_6 = arith.constant dense<0.000000e+00> : vector<8x32xf32>
    %6 = tpu.matmul %4, %5, %cst_6 {dimension_numbers = #tpu.dot_dimension_numbers<[1], [0], [0], [1], [0, 0, 1, 1], [], []>} : vector<8x32xf32>, vector<32x32xf32>, vector<8x32xf32> -> vector<8x32xf32>
    %c0_7 = arith.constant 0 : index
    %c0_8 = arith.constant 0 : index
    %7 = vector.load %arg4[%c0_7, %c0_8] : memref<8x32xf32, #tpu.memory_space<vmem>>, vector<8x32xf32>
    tpu.vector_store %arg4[%c0_7, %c0_8], %6 {strides = array<i32>} : memref<8x32xf32, #tpu.memory_space<vmem>>, vector<8x32xf32>,
    return
  }
  func.func @transform_0(%arg0: i32) -> (i32, i32) {
    %c0_i32 = arith.constant 0 : i32
    %c0_i32_0 = arith.constant 0 : i32
    return %arg0, %c0_i32 : i32, i32
  }
  func.func @transform_1(%arg0: i32) -> (i32, i32) {
    %c0_i32 = arith.constant 0 : i32
    %c0_i32_0 = arith.constant 0 : i32
    %c0_i32_1 = arith.constant 0 : i32
    return %c0_i32, %c0_i32_0 : i32, i32
  }
  func.func @transform_2(%arg0: i32) -> (i32, i32) {
    %c0_i32 = arith.constant 0 : i32
    %c0_i32_0 = arith.constant 0 : i32
    %c0_i32_1 = arith.constant 0 : i32
    return %c0_i32, %c0_i32_0 : i32, i32
  }
  func.func @transform_3(%arg0: i32) -> (i32, i32) {
    %c0_i32 = arith.constant 0 : i32
    %c0_i32_0 = arith.constant 0 : i32
    return %arg0, %c0_i32 : i32, i32
  }
}

</mosaic_0001>

<llo_original>
// kernel: tpu_custom_call.1
$region0: #{tpu_custom_call.1}
  #allocation0 [shape = 'u32[]', space=smem, size = 0x4, offset = 0x4, fixed_abs, tag = 'smem constant byte address 0x4 - core index']
  #allocation1 [shape = 'u32[144,128]{1,0:T(1,128)}', space=vmem, size = 0x12000, scoped, tag = 'internal scratch']
  %s0 = inlined_call_operand.hbm [shape: f32[8,32], index: 0, kind: input, shape index: {}]
  %s1 = inlined_call_operand.hbm [shape: f32[32,32], index: 1, kind: input, shape index: {}]
  %s2 = inlined_call_operand.hbm [shape: f32[32,32], index: 2, kind: input, shape index: {}]
  %s3 = inlined_call_operand.hbm [shape: f32[8,32], index: 3, kind: output, shape index: {}]
  %s4 = sld [smem:[#allocation0]]
  $region34: #{tpu_custom_call.1} parent=0
    _
  %s6 = ssub.s32 1, %s4
  %s7 = scalar_select 0, %s6, %s4
  $region1: #{tpu_custom_call.1} parent=0
    #allocation2 [shape = 'u8[4096]{0}', space=vmem, size = 0x1000, scoped, tag = 'input window, operand 0, single buffered']
    #allocation3 [shape = 's32[1]{0}', space=sflag, size = 0x4, scoped, tag = 'scoped memory for tpu_custom_call.1']
    #allocation4 [shape = 's32[1]{0}', space=sflag, size = 0x4, scoped, tag = 'scoped memory for tpu_custom_call.1']
    #allocation5 [shape = 'u8[16384]{0}', space=vmem, size = 0x4000, scoped, tag = 'input window, operand 1, single buffered']
    #allocation6 [shape = 's32[1]{0}', space=sflag, size = 0x4, scoped, tag = 'scoped memory for tpu_custom_call.1']
    #allocation7 [shape = 'u8[16384]{0}', space=vmem, size = 0x4000, scoped, tag = 'input window, operand 2, single buffered']
    #allocation8 [shape = 'u8[4096]{0}', space=vmem, size = 0x1000, scoped, tag = 'output window, operand 0, single buffered']
    %8 = vsyncpa [#allocation3], 0
    %9 = vsyncpa [#allocation6], 0
    %10 = vsyncpa [#allocation4], 0
    // Predicated region
    $region2: #{tpu_custom_call.1} parent=1 // pred_check
      _
    $region3: #{tpu_custom_call.1} parent=1 // pred_check_branch
      %12 = sbr.rel (0) target = $region5
    $region4: #{tpu_custom_call.1} parent=1 // pred_region
      %s14 = ssub.s32 128, 128
      %15 = vsyncadd [#allocation3], %s14
      %s17 = sshll.u32 [#allocation2], 4
      %s18 = int_to_ptr.vmem [resolvable:$true] %s17
      %20 = dma.hbm_to_vmem [thread:$0]  %s0, 128, %s18, [#allocation3]
    $region5: #{tpu_custom_call.1} parent=1 // pred_fallthru
      _
    // Predicated region
    $region6: #{tpu_custom_call.1} parent=1 // pred_check
      _
    $region7: #{tpu_custom_call.1} parent=1 // pred_check_branch
      %22 = sbr.rel (0) target = $region9
    $region8: #{tpu_custom_call.1} parent=1 // pred_region
      %s24 = ssub.s32 512, 512
      %25 = vsyncadd [#allocation6], %s24
      %s26 = sshll.u32 [#allocation5], 4
      %s27 = int_to_ptr.vmem [resolvable:$true] %s26
      %32 = dma.hbm_to_vmem [thread:$0]  %s1, 512, %s27, [#allocation6], 128, 128, 8
    $region9: #{tpu_custom_call.1} parent=1 // pred_fallthru
      _
    // Predicated region
    $region10: #{tpu_custom_call.1} parent=1 // pred_check
      _
    $region11: #{tpu_custom_call.1} parent=1 // pred_check_branch
      %34 = sbr.rel (0) target = $region13
    $region12: #{tpu_custom_call.1} parent=1 // pred_region
      %s36 = ssub.s32 512, 512
      %37 = vsyncadd [#allocation6], %s36
      %s38 = sshll.u32 [#allocation7], 4
      %s39 = int_to_ptr.vmem [resolvable:$true] %s38
      %44 = dma.hbm_to_vmem [thread:$0]  %s2, 512, %s39, [#allocation6], 128, 128, 8
    $region13: #{tpu_custom_call.1} parent=1 // pred_fallthru
      _
    // Predicated region
    $region14: #{tpu_custom_call.1} parent=1 // pred_check
      _
    $region15: #{tpu_custom_call.1} parent=1 // pred_check_branch
      %46 = sbr.rel (0) target = $region17
    $region16: #{tpu_custom_call.1} parent=1 // pred_region
      %47 = dma.done [#allocation3], 128
    $region17: #{tpu_custom_call.1} parent=1 // pred_fallthru
      _
    // Predicated region
    $region18: #{tpu_custom_call.1} parent=1 // pred_check
      _
    $region19: #{tpu_custom_call.1} parent=1 // pred_check_branch
      %49 = sbr.rel (0) target = $region21
    $region20: #{tpu_custom_call.1} parent=1 // pred_region
      %50 = dma.done [#allocation6], 512
    $region21: #{tpu_custom_call.1} parent=1 // pred_fallthru
      _
    // Predicated region
    $region22: #{tpu_custom_call.1} parent=1 // pred_check
      _
    $region23: #{tpu_custom_call.1} parent=1 // pred_check_branch
      %52 = sbr.rel (0) target = $region25
    $region24: #{tpu_custom_call.1} parent=1 // pred_region
      %53 = dma.done [#allocation6], 512
    $region25: #{tpu_custom_call.1} parent=1 // pred_fallthru
      _
    %v54 = vld [vmem:[#allocation2] sm:$0xff]
    %v55 = vld [vmem:[#allocation5] sm:$0xff]
    %v56 = vld [vmem:[#allocation5 + $0x8] sm:$0xff]
    %v57 = vld [vmem:[#allocation5 + $0x10] sm:$0xff]
    %v58 = vld [vmem:[#allocation5 + $0x18] sm:$0xff]
    %vm59 = vcmask 261120
    %v61 = vsel %vm59, %v54, 0
    %63 = vmatprep.subr.mxu0 0.0
    %64 = vmatpush1.msra.mxu0 %v55
    %65 = vmatprep.subr.mxu0 0.0
    %66 = vmatpush1.msra.mxu0 %v56
    %67 = vmatprep.subr.mxu0 0.0
    %68 = vmatpush1.msra.mxu0 %v57
    %69 = vmatprep.subr.mxu0 0.0
    %70 = vmatpush1.msra.mxu0 %v58
    %71 = vmatprep.subr.mxu0 0.0
    %72 = vmatpush1.msra.mxu0 0.0
    %73 = vmatprep.subr.mxu0 0.0
    %74 = vmatpush1.msra.mxu0 0.0
    %75 = vmatprep.subr.mxu0 0.0
    %76 = vmatpush1.msra.mxu0 0.0
    %77 = vmatprep.subr.mxu0 0.0
    %78 = vmatpush1.msra.mxu0 0.0
    %79 = vmatprep.subr.mxu0 0.0
    %80 = vmatpush1.msra.mxu0 0.0
    %81 = vmatprep.subr.mxu0 0.0
    %82 = vmatpush1.msra.mxu0 0.0
    %83 = vmatprep.subr.mxu0 0.0
    %84 = vmatpush1.msra.mxu0 0.0
    %85 = vmatprep.subr.mxu0 0.0
    %86 = vmatpush1.msra.mxu0 0.0
    %87 = vmatprep.subr.mxu0 0.0
    %88 = vmatpush1.msra.mxu0 0.0
    %89 = vmatprep.subr.mxu0 0.0
    %90 = vmatpush1.msra.mxu0 0.0
    %91 = vmatprep.subr.mxu0 0.0
    %92 = vmatpush1.msra.mxu0 0.0
    %93 = vmatprep.subr.mxu0 0.0
    %94 = vmatpush1.msra.mxu0 0.0
    %95 = vmatprep.subr.mxu0 0.0
    %96 = vmatpush1.msra.mxu0 0.0
    %97 = vmatprep.subr.mxu0 0.0
    %98 = vmatpush1.msra.mxu0 0.0
    %99 = vmatprep.subr.mxu0 0.0
    %100 = vmatpush1.msra.mxu0 0.0
    %101 = vmatprep.subr.mxu0 0.0
    %102 = vmatpush1.msra.mxu0 0.0
    %103 = vmatprep.subr.mxu0 0.0
    %104 = vmatpush1.msra.mxu0 0.0
    %105 = vmatprep.subr.mxu0 0.0
    %106 = vmatpush1.msra.mxu0 0.0
    %107 = vmatprep.subr.mxu0 0.0
    %108 = vmatpush1.msra.mxu0 0.0
    %109 = vmatprep.subr.mxu0 0.0
    %110 = vmatpush1.msra.mxu0 0.0
    %111 = vmatprep.subr.mxu0 0.0
    %112 = vmatpush1.msra.mxu0 0.0
    %113 = vmatprep.subr.mxu0 0.0
    %114 = vmatpush1.msra.mxu0 0.0
    %115 = vmatprep.subr.mxu0 0.0
    %116 = vmatpush1.msra.mxu0 0.0
    %117 = vmatprep.subr.mxu0 0.0
    %118 = vmatpush1.msra.mxu0 0.0
    %119 = vmatprep.subr.mxu0 0.0
    %120 = vmatpush1.msra.mxu0 0.0
    %121 = vmatprep.subr.mxu0 0.0
    %122 = vmatpush1.msra.mxu0 0.0
    %123 = vmatprep.subr.mxu0 0.0
    %124 = vmatpush1.msra.mxu0 0.0
    %125 = vmatprep.subr.mxu0 0.0
    %126 = vmatpush1.msra.mxu0 0.0
    %127 = vmatprep.mubr.f32.mxu0 0.0
    %128 = vmatmul.mubr.f32.gmra.mrb[0].mxu0 %v61
    %v129 = vpop.f32.mrb[0].mxu0
    %v130 = vadd.f32 0.0, %v129
    %v131 = vpop.f32.mrb[0].mxu0
    %132 = vdwg.mxu0
    %v133 = vmax.f32 %v130, 0.0
    %v134 = vld [vmem:[#allocation7] sm:$0xff]
    %v135 = vld [vmem:[#allocation7 + $0x8] sm:$0xff]
    %v136 = vld [vmem:[#allocation7 + $0x10] sm:$0xff]
    %v137 = vld [vmem:[#allocation7 + $0x18] sm:$0xff]
    %v139 = vsel %vm59, %v133, 0
    %141 = vmatprep.subr.mxu0 0.0
    %142 = vmatpush1.msra.mxu0 %v134
    %143 = vmatprep.subr.mxu0 0.0
    %144 = vmatpush1.msra.mxu0 %v135
    %145 = vmatprep.subr.mxu0 0.0
    %146 = vmatpush1.msra.mxu0 %v136
    %147 = vmatprep.subr.mxu0 0.0
    %148 = vmatpush1.msra.mxu0 %v137
    %149 = vmatprep.subr.mxu0 0.0
    %150 = vmatpush1.msra.mxu0 0.0
    %151 = vmatprep.subr.mxu0 0.0
    %152 = vmatpush1.msra.mxu0 0.0
    %153 = vmatprep.subr.mxu0 0.0
    %154 = vmatpush1.msra.mxu0 0.0
    %155 = vmatprep.subr.mxu0 0.0
    %156 = vmatpush1.msra.mxu0 0.0
    %157 = vmatprep.subr.mxu0 0.0
    %158 = vmatpush1.msra.mxu0 0.0
    %159 = vmatprep.subr.mxu0 0.0
    %160 = vmatpush1.msra.mxu0 0.0
    %161 = vmatprep.subr.mxu0 0.0
    %162 = vmatpush1.msra.mxu0 0.0
    %163 = vmatprep.subr.mxu0 0.0
    %164 = vmatpush1.msra.mxu0 0.0
    %165 = vmatprep.subr.mxu0 0.0
    %166 = vmatpush1.msra.mxu0 0.0
    %167 = vmatprep.subr.mxu0 0.0
    %168 = vmatpush1.msra.mxu0 0.0
    %169 = vmatprep.subr.mxu0 0.0
    %170 = vmatpush1.msra.mxu0 0.0
    %171 = vmatprep.subr.mxu0 0.0
    %172 = vmatpush1.msra.mxu0 0.0
    %173 = vmatprep.subr.mxu0 0.0
    %174 = vmatpush1.msra.mxu0 0.0
    %175 = vmatprep.subr.mxu0 0.0
    %176 = vmatpush1.msra.mxu0 0.0
    %177 = vmatprep.subr.mxu0 0.0
    %178 = vmatpush1.msra.mxu0 0.0
    %179 = vmatprep.subr.mxu0 0.0
    %180 = vmatpush1.msra.mxu0 0.0
    %181 = vmatprep.subr.mxu0 0.0
    %182 = vmatpush1.msra.mxu0 0.0
    %183 = vmatprep.subr.mxu0 0.0
    %184 = vmatpush1.msra.mxu0 0.0
    %185 = vmatprep.subr.mxu0 0.0
    %186 = vmatpush1.msra.mxu0 0.0
    %187 = vmatprep.subr.mxu0 0.0
    %188 = vmatpush1.msra.mxu0 0.0
    %189 = vmatprep.subr.mxu0 0.0
    %190 = vmatpush1.msra.mxu0 0.0
    %191 = vmatprep.subr.mxu0 0.0
    %192 = vmatpush1.msra.mxu0 0.0
    %193 = vmatprep.subr.mxu0 0.0
    %194 = vmatpush1.msra.mxu0 0.0
    %195 = vmatprep.subr.mxu0 0.0
    %196 = vmatpush1.msra.mxu0 0.0
    %197 = vmatprep.subr.mxu0 0.0
    %198 = vmatpush1.msra.mxu0 0.0
    %199 = vmatprep.subr.mxu0 0.0
    %200 = vmatpush1.msra.mxu0 0.0
    %201 = vmatprep.subr.mxu0 0.0
    %202 = vmatpush1.msra.mxu0 0.0
    %203 = vmatprep.subr.mxu0 0.0
    %204 = vmatpush1.msra.mxu0 0.0
    %205 = vmatprep.mubr.f32.mxu0 0.0
    %206 = vmatmul.mubr.f32.gmra.mrb[0].mxu0 %v139
    %v207 = vpop.f32.mrb[0].mxu0
    %v208 = vadd.f32 0.0, %v207
    %v209 = vpop.f32.mrb[0].mxu0
    %210 = vdwg.mxu0
    %211 = vst.msk [vmem:[#allocation8] sm:$0xff] %vm59, %v208
    // Predicated region
    $region26: #{tpu_custom_call.1} parent=1 // pred_check
      _
    $region27: #{tpu_custom_call.1} parent=1 // pred_check_branch
      %213 = sbr.rel (0) target = $region29
    $region28: #{tpu_custom_call.1} parent=1 // pred_region
      %s215 = ssub.s32 128, 128
      %216 = vsyncadd [#allocation4], %s215
      %s218 = sshll.u32 [#allocation8], 4
      %s219 = int_to_ptr.vmem [resolvable:$true] %s218
      %221 = dma.vmem_to_hbm [thread:$0]  %s219, 128, %s3, [#allocation4]
    $region29: #{tpu_custom_call.1} parent=1 // pred_fallthru
      _
    // Predicated region
    $region30: #{tpu_custom_call.1} parent=1 // pred_check
      _
    $region31: #{tpu_custom_call.1} parent=1 // pred_check_branch
      %223 = sbr.rel (0) target = $region33
    $region32: #{tpu_custom_call.1} parent=1 // pred_region
      %224 = dma.done [#allocation4], 128
    $region33: #{tpu_custom_call.1} parent=1 // pred_fallthru
      _
    %225 = vsyncpa [#allocation3], 1
    %226 = vsyncpa [#allocation6], 1
    %227 = vsyncpa [#allocation4], 1

</llo_original>
